<compile_context>
chip_gen: v7x
topology: tpu7x:2x2x1
jax: 0.10.0
libtpu: 0.0.40
codegen_flags: <defaults>
</compile_context>

<pallas_src>
import jax
import jax.numpy as jnp
from jax.experimental import pallas as pl
from jax.experimental.pallas import tpu as pltpu

PERT_RATIO = 0.1          # perturbation ratio (module __init__ arg)
NUM_CLASSES = 10
LANE = 128                # pad class dim to one full lane width


def _perturb_kernel(x_ref, w_ref, b_ref, z_ref, o_ref):
    """Grid is over the K (contraction) axis; o_ref is resident across it."""
    k = pl.program_id(0)

    @pl.when(k == 0)
    def _init():
        o_ref[...] = jnp.zeros_like(o_ref)

    # Partial matmul for this K tile (bf16 inputs, f32 accumulate on the MXU).
    o_ref[...] += jnp.dot(
        x_ref[...], w_ref[...], preferred_element_type=jnp.float32
    )

    @pl.when(k == pl.num_programs(0) - 1)
    def _finalize():
        logits = o_ref[...] + b_ref[...]          # (B, 128); padded cols == 0
        # Global mean(|logits|) over the REAL classes only: padded columns
        # contribute 0 to the sum, so divide by B * NUM_CLASSES.
        inv = jnp.float32(1.0) / jnp.float32(o_ref.shape[0] * NUM_CLASSES)
        logit_mean = jnp.sum(jnp.abs(logits)) * inv
        noise_std = logit_mean * jnp.float32(PERT_RATIO * 5.0)
        o_ref[...] = logits + noise_std * z_ref[...]


def perturb_model_forward(x_nchw, w, b, key, *, tk=256):
    """x_nchw: (B,C,H,W) f32; w: (K, NUM_CLASSES); b: (NUM_CLASSES,) or (1,NUM_CLASSES)."""
    B = x_nchw.shape[0]
    K, n_classes = w.shape
    n_pad = ((n_classes + LANE - 1) // LANE) * LANE
    assert K % tk == 0, "K must be divisible by the K tile size"

    # glue: flatten like torch .view(B, -1); bf16 halves HBM traffic.
    x_flat = x_nchw.reshape(B, -1).astype(jnp.bfloat16)

    # Zero-pad class dim to a lane-dense width (extra columns stay exactly 0).
    w_pad = jnp.zeros((K, n_pad), dtype=jnp.bfloat16)
    w_pad = w_pad.at[:, :n_classes].set(w.astype(jnp.bfloat16))
    b_pad = jnp.zeros((1, n_pad), dtype=jnp.float32)
    b_pad = b_pad.at[:, :n_classes].set(b.reshape(1, -1).astype(jnp.float32))

    # Standard-normal draws; scaled by the in-kernel noise_std.
    z = jax.random.normal(key, (B, n_pad), dtype=jnp.float32)

    grid = (K // tk,)
    out_padded = pl.pallas_call(
        _perturb_kernel,
        out_shape=jax.ShapeDtypeStruct((B, n_pad), jnp.float32),
        grid=grid,
        in_specs=[
            pl.BlockSpec((B, tk), lambda k: (0, k)),        # x: stream K tiles
            pl.BlockSpec((tk, n_pad), lambda k: (k, 0)),    # W: stream K tiles
            pl.BlockSpec((1, n_pad), lambda k: (0, 0)),     # b: resident
            pl.BlockSpec((B, n_pad), lambda k: (0, 0)),     # z: resident
        ],
        out_specs=pl.BlockSpec((B, n_pad), lambda k: (0, 0)),  # accumulator
        compiler_params=pltpu.CompilerParams(
            dimension_semantics=("arbitrary",),             # K is a reduction
        ),
        cost_estimate=pl.CostEstimate(
            flops=2 * B * K * n_pad,
            transcendentals=0,
            bytes_accessed=B * K * 2 + K * n_pad * 2 + B * n_pad * 4,
        ),
    )(x_flat, w_pad, b_pad, z)

    return out_padded[:, :n_classes]


if __name__ == "__main__":
    key = jax.random.PRNGKey(0)
    kx, kw, kz = jax.random.split(key, 3)

    B, C, H, W = 2, 4, 16, 16
    in_features = C * H * W                      # K = 1024

    x = jax.random.normal(kx, (B, C, H, W), dtype=jnp.float32)
    # deterministic synthetic parameters for the inner linear classifier
    w = jax.random.normal(kw, (in_features, NUM_CLASSES), dtype=jnp.float32) * 0.02
    b = jnp.zeros((NUM_CLASSES,), dtype=jnp.float32)

    out = perturb_model_forward(x, w, b, kz)
    jax.block_until_ready(out)

    assert out.shape == (B, NUM_CLASSES)
    assert out.dtype == jnp.float32
    assert bool(jnp.all(jnp.isfinite(out)))
    print("KERNEL_OK")
</pallas_src>

<mosaic_0001>
module attributes {stable_mosaic.version = 11 : i64} {
  func.func @_perturb_kernel(%arg0: i32, %arg1: memref<2x256xbf16, #tpu.memory_space<vmem>>, %arg2: memref<256x128xbf16, #tpu.memory_space<vmem>>, %arg3: memref<1x128xf32, #tpu.memory_space<vmem>>, %arg4: memref<2x128xf32, #tpu.memory_space<vmem>>, %arg5: memref<2x128xf32, #tpu.memory_space<vmem>>) attributes {dimension_semantics = [#tpu.dimension_semantics<arbitrary>], iteration_bounds = array<i64: 4>, scalar_prefetch = 0 : i64, scratch_operands = 0 : i64, tpu.core_type = #tpu.core_type<tc>, window_params = [{transform_indices = @transform_0, window_bounds = array<i64: 2, 256>}, {transform_indices = @transform_1, window_bounds = array<i64: 256, 128>}, {pipeline_mode = #tpu.pipeline_mode<synchronous>, transform_indices = @transform_2, window_bounds = array<i64: 1, 128>}, {pipeline_mode = #tpu.pipeline_mode<synchronous>, transform_indices = @transform_3, window_bounds = array<i64: 2, 128>}, {pipeline_mode = #tpu.pipeline_mode<synchronous>, transform_indices = @transform_4, window_bounds = array<i64: 2, 128>}]} {
    %c0_i32 = arith.constant 0 : i32
    %0 = arith.cmpi eq, %arg0, %c0_i32 : i32
    %1 = arith.extui %0 : i1 to i32
    %c0_i32_0 = arith.constant 0 : i32
    %2 = arith.cmpi ne, %1, %c0_i32_0 : i32
    scf.if %2 {
      %cst_9 = arith.constant 0.000000e+00 : f32
      %12 = vector.broadcast %cst_9 : f32 to vector<2x128xf32>
      %c0_10 = arith.constant 0 : index
      %c0_11 = arith.constant 0 : index
      %13 = vector.load %arg5[%c0_10, %c0_11] : memref<2x128xf32, #tpu.memory_space<vmem>>, vector<2x128xf32>
      tpu.vector_store %arg5[%c0_10, %c0_11], %12 {strides = array<i32>} : memref<2x128xf32, #tpu.memory_space<vmem>>, vector<2x128xf32>,
    } else {
    }
    %c0 = arith.constant 0 : index
    %c0_1 = arith.constant 0 : index
    %3 = vector.load %arg5[%c0, %c0_1] : memref<2x128xf32, #tpu.memory_space<vmem>>, vector<2x128xf32>
    %c0_2 = arith.constant 0 : index
    %c0_3 = arith.constant 0 : index
    %4 = vector.load %arg1[%c0_2, %c0_3] : memref<2x256xbf16, #tpu.memory_space<vmem>>, vector<2x256xbf16>
    %c0_4 = arith.constant 0 : index
    %c0_5 = arith.constant 0 : index
    %5 = vector.load %arg2[%c0_4, %c0_5] : memref<256x128xbf16, #tpu.memory_space<vmem>>, vector<256x128xbf16>
    %cst = arith.constant dense<0.000000e+00> : vector<2x128xf32>
    %6 = tpu.matmul %4, %5, %cst {dimension_numbers = #tpu.dot_dimension_numbers<[1], [0], [0], [1], [0, 0, 1, 1], [], []>} : vector<2x256xbf16>, vector<256x128xbf16>, vector<2x128xf32> -> vector<2x128xf32>
    %7 = arith.addf %3, %6 : vector<2x128xf32>
    %c0_6 = arith.constant 0 : index
    %c0_7 = arith.constant 0 : index
    %8 = vector.load %arg5[%c0_6, %c0_7] : memref<2x128xf32, #tpu.memory_space<vmem>>, vector<2x128xf32>
    tpu.vector_store %arg5[%c0_6, %c0_7], %7 {strides = array<i32>} : memref<2x128xf32, #tpu.memory_space<vmem>>, vector<2x128xf32>,
    %c3_i32 = arith.constant 3 : i32
    %9 = arith.cmpi eq, %arg0, %c3_i32 : i32
    %10 = arith.extui %9 : i1 to i32
    %c0_i32_8 = arith.constant 0 : i32
    %11 = arith.cmpi ne, %10, %c0_i32_8 : i32
    scf.if %11 {
      %c0_9 = arith.constant 0 : index
      %c0_10 = arith.constant 0 : index
      %12 = vector.load %arg5[%c0_9, %c0_10] : memref<2x128xf32, #tpu.memory_space<vmem>>, vector<2x128xf32>
      %c0_11 = arith.constant 0 : index
      %c0_12 = arith.constant 0 : index
      %13 = vector.load %arg3[%c0_11, %c0_12] : memref<1x128xf32, #tpu.memory_space<vmem>>, vector<1x128xf32>
      %14 = vector.broadcast %13 : vector<1x128xf32> to vector<2x128xf32>
      %15 = arith.addf %12, %14 : vector<2x128xf32>
      %cst_13 = arith.constant 1.000000e+00 : f32
      %cst_14 = arith.constant 2.000000e+01 : f32
      %16 = arith.divf %cst_13, %cst_14 : f32
      %17 = math.absf %15 : vector<2x128xf32>
      %18 = vector.shape_cast %17 : vector<2x128xf32> to vector<1x2x128xf32>
      %cst_15 = arith.constant dense<0.000000e+00> : vector<1xf32>
      %19 = vector.multi_reduction <add>, %18, %cst_15 [1, 2] : vector<1x2x128xf32> to vector<1xf32>
      %20 = vector.shape_cast %19 : vector<1xf32> to vector<1x1x1xf32>
      %21 = vector.extract %20[0, 0, 0] : f32 from vector<1x1x1xf32>
      %22 = arith.mulf %21, %16 : f32
      %cst_16 = arith.constant 5.000000e-01 : f32
      %23 = arith.mulf %22, %cst_16 : f32
      %c0_17 = arith.constant 0 : index
      %c0_18 = arith.constant 0 : index
      %24 = vector.load %arg4[%c0_17, %c0_18] : memref<2x128xf32, #tpu.memory_space<vmem>>, vector<2x128xf32>
      %25 = vector.broadcast %23 : f32 to vector<2x128xf32>
      %26 = arith.mulf %25, %24 : vector<2x128xf32>
      %27 = arith.addf %15, %26 : vector<2x128xf32>
      %c0_19 = arith.constant 0 : index
      %c0_20 = arith.constant 0 : index
      %28 = vector.load %arg5[%c0_19, %c0_20] : memref<2x128xf32, #tpu.memory_space<vmem>>, vector<2x128xf32>
      tpu.vector_store %arg5[%c0_19, %c0_20], %27 {strides = array<i32>} : memref<2x128xf32, #tpu.memory_space<vmem>>, vector<2x128xf32>,
    } else {
    }
    return
  }
  func.func @transform_0(%arg0: i32) -> (i32, i32) {
    %c0_i32 = arith.constant 0 : i32
    %c0_i32_0 = arith.constant 0 : i32
    return %c0_i32, %arg0 : i32, i32
  }
  func.func @transform_1(%arg0: i32) -> (i32, i32) {
    %c0_i32 = arith.constant 0 : i32
    %c0_i32_0 = arith.constant 0 : i32
    return %arg0, %c0_i32 : i32, i32
  }
  func.func @transform_2(%arg0: i32) -> (i32, i32) {
    %c0_i32 = arith.constant 0 : i32
    %c0_i32_0 = arith.constant 0 : i32
    %c0_i32_1 = arith.constant 0 : i32
    return %c0_i32, %c0_i32_0 : i32, i32
  }
  func.func @transform_3(%arg0: i32) -> (i32, i32) {
    %c0_i32 = arith.constant 0 : i32
    %c0_i32_0 = arith.constant 0 : i32
    %c0_i32_1 = arith.constant 0 : i32
    return %c0_i32, %c0_i32_0 : i32, i32
  }
  func.func @transform_4(%arg0: i32) -> (i32, i32) {
    %c0_i32 = arith.constant 0 : i32
    %c0_i32_0 = arith.constant 0 : i32
    %c0_i32_1 = arith.constant 0 : i32
    return %c0_i32, %c0_i32_0 : i32, i32
  }
}

</mosaic_0001>

<llo_original>
// kernel: tpu_custom_call.1
$region0: #{tpu_custom_call.1}
  #allocation0 [shape = 'u32[]', space=smem, size = 0x4, offset = 0x4, fixed_abs, tag = 'smem constant byte address 0x4 - core index']
  #allocation1 [shape = 'u32[144,128]{1,0:T(1,128)}', space=vmem, size = 0x12000, scoped, tag = 'internal scratch']
  %s0 = inlined_call_operand.hbm [shape: bf16[2,1024], index: 0, kind: input, shape index: {}]
  %s1 = inlined_call_operand.hbm [shape: bf16[1024,128], index: 1, kind: input, shape index: {}]
  %s2 = inlined_call_operand.vmem [shape: f32[1,128], index: 2, kind: input, shape index: {}]
  %s3 = inlined_call_operand.vmem [shape: f32[2,128], index: 3, kind: input, shape index: {}]
  %s4 = inlined_call_operand.hbm [shape: f32[2,128], index: 4, kind: output, shape index: {}]
  %s5 = sld [smem:[#allocation0]]
  $region65: #{tpu_custom_call.1} parent=0
    _
  %s7 = ssub.s32 1, %s5
  %s8 = scalar_select 0, %s7, %s5
  $region1: #{tpu_custom_call.1} parent=0
    #allocation2 [shape = 'u8[2048]{0}', space=vmem, size = 0x800, scoped, tag = 'input window, operand 0']
    #allocation3 [shape = 's32[2]{0}', space=sflag, size = 0x8, scoped, tag = 'scoped memory for tpu_custom_call.1']
    #allocation4 [shape = 's32[2]{0}', space=sflag, size = 0x8, scoped, tag = 'scoped memory for tpu_custom_call.1']
    #allocation5 [shape = 'u8[131072]{0}', space=vmem, size = 0x20000, scoped, tag = 'input window, operand 1']
    #allocation6 [shape = 's32[2]{0}', space=sflag, size = 0x8, scoped, tag = 'scoped memory for tpu_custom_call.1']
    #allocation7 [shape = 'u8[1024]{0}', space=vmem, size = 0x400, scoped, tag = 'output window, operand 0, single buffered']
    %9 = vsyncpa [#allocation3], 0
    %s10 = scalar_lea.sflag [#allocation3], 1
    %11 = vsyncpa %s10, 0
    %12 = vsyncpa [#allocation6], 0
    %s13 = scalar_lea.sflag [#allocation6], 1
    %14 = vsyncpa %s13, 0
    %15 = vsyncpa [#allocation4], 0
    loop: start=0, step=1, limit=6
    $region2: #{tpu_custom_call.1} parent=1 // loop_pre_header
      _
    $region3: #{tpu_custom_call.1} parent=1 // loop_header
      %s17 = sphi 0, %s21
      %p18 = scmp.ge.s32.totalorder %s17, 6
      %s27 = sphi 0, %s29
      %s30 = sphi 0, %s27
      %s31 = sphi 0, %s30
      %s47 = sphi 0, %s31
      %s53 = sphi 0, %s55
      %s56 = sphi 0, %s53
      %s57 = sphi 0, %s56
      %s73 = sphi 0, %s57
      %s77 = sphi 0, %s77
      %s79 = sphi 0, %s77
      %s80 = sphi 0, %s79
      %s94 = sphi 0, %s80
      %s98 = sphi 0, %s98
      %s100 = sphi 0, %s98
      %s101 = sphi 0, %s100
      %s115 = sphi 0, %s101
      %s119 = sphi 0, %s119
      %s121 = sphi 0, %s119
      %s122 = sphi 0, %s121
      %s136 = sphi 0, %s122
    $region4: #{tpu_custom_call.1} parent=1 // loop_header_branch
      %20 = sbr.rel (%p18) target = $region8
    $region5: #{tpu_custom_call.1} parent=1 // loop_body
      %s22 = ssub.s32 %s17, 1
      %s23 = ssub.s32 %s17, 2
      %s24 = sadd.s32 %s17, 1
      %s25 = ssub.s32 %s17, %s24
      %p26 = scmp.eq.s32.totalorder %s25, 0
      %s28 = sadd.s32 %s27, 1
      %s29 = scalar_select %p26, %s27, %s28
      %p32 = pneg %p26
      %p33 = scmp.eq.s32.totalorder %s17, 3
      %p34 = por %p32, %p33
      %p35 = scmp.ne.s32.totalorder %s27, %s30
      %p36 = scmp.eq.s32.totalorder %s17, 0
      %p37 = por %p35, %p36
      %p38 = scmp.ne.s32.totalorder %s27, %s30
      %p39 = scmp.eq.s32.totalorder %s22, 3
      %p40 = por %p38, %p39
      %p41 = scmp.ne.s32.totalorder %s30, %s31
      %p42 = scmp.eq.s32.totalorder %s22, 0
      %p43 = por %p41, %p42
      %p44 = scmp.ne.s32.totalorder %s30, %s31
      %p45 = scmp.eq.s32.totalorder %s23, 3
      %p46 = por %p44, %p45
      %p48 = scmp.ne.s32.totalorder %s31, %s47
      %p49 = scmp.eq.s32.totalorder %s23, 0
      %p50 = por %p48, %p49
      %s51 = ssub.s32 %s17, %s24
      %p52 = scmp.eq.s32.totalorder %s51, 0
      %s54 = sadd.s32 %s53, 1
      %s55 = scalar_select %p52, %s53, %s54
      %p58 = pneg %p52
      %p59 = scmp.eq.s32.totalorder %s17, 3
      %p60 = por %p58, %p59
      %p61 = scmp.ne.s32.totalorder %s53, %s56
      %p62 = scmp.eq.s32.totalorder %s17, 0
      %p63 = por %p61, %p62
      %p64 = scmp.ne.s32.totalorder %s53, %s56
      %p65 = scmp.eq.s32.totalorder %s22, 3
      %p66 = por %p64, %p65
      %p67 = scmp.ne.s32.totalorder %s56, %s57
      %p68 = scmp.eq.s32.totalorder %s22, 0
      %p69 = por %p67, %p68
      %p70 = scmp.ne.s32.totalorder %s56, %s57
      %p71 = scmp.eq.s32.totalorder %s23, 3
      %p72 = por %p70, %p71
      %p74 = scmp.ne.s32.totalorder %s57, %s73
      %p75 = scmp.eq.s32.totalorder %s23, 0
      %p76 = por %p74, %p75
      %s78 = sadd.s32 %s77, 1
      %p81 = scmp.eq.s32.totalorder %s17, 3
      %p82 = scmp.ne.s32.totalorder %s77, %s79
      %p83 = scmp.eq.s32.totalorder %s17, 0
      %p84 = por %p82, %p83
      %p85 = scmp.ne.s32.totalorder %s77, %s79
      %p86 = scmp.eq.s32.totalorder %s22, 3
      %p87 = por %p85, %p86
      %p88 = scmp.ne.s32.totalorder %s79, %s80
      %p89 = scmp.eq.s32.totalorder %s22, 0
      %p90 = por %p88, %p89
      %p91 = scmp.ne.s32.totalorder %s79, %s80
      %p92 = scmp.eq.s32.totalorder %s23, 3
      %p93 = por %p91, %p92
      %p95 = scmp.ne.s32.totalorder %s80, %s94
      %p96 = scmp.eq.s32.totalorder %s23, 0
      %p97 = por %p95, %p96
      %s99 = sadd.s32 %s98, 1
      %p102 = scmp.eq.s32.totalorder %s17, 3
      %p103 = scmp.ne.s32.totalorder %s98, %s100
      %p104 = scmp.eq.s32.totalorder %s17, 0
      %p105 = por %p103, %p104
      %p106 = scmp.ne.s32.totalorder %s98, %s100
      %p107 = scmp.eq.s32.totalorder %s22, 3
      %p108 = por %p106, %p107
      %p109 = scmp.ne.s32.totalorder %s100, %s101
      %p110 = scmp.eq.s32.totalorder %s22, 0
      %p111 = por %p109, %p110
      %p112 = scmp.ne.s32.totalorder %s100, %s101
      %p113 = scmp.eq.s32.totalorder %s23, 3
      %p114 = por %p112, %p113
      %p116 = scmp.ne.s32.totalorder %s101, %s115
      %p117 = scmp.eq.s32.totalorder %s23, 0
      %p118 = por %p116, %p117
      %s120 = sadd.s32 %s119, 1
      %p123 = scmp.eq.s32.totalorder %s17, 3
      %p124 = scmp.ne.s32.totalorder %s119, %s121
      %p125 = scmp.eq.s32.totalorder %s17, 0
      %p126 = por %p124, %p125
      %p127 = scmp.ne.s32.totalorder %s119, %s121
      %p128 = scmp.eq.s32.totalorder %s22, 3
      %p129 = por %p127, %p128
      %p130 = scmp.ne.s32.totalorder %s121, %s122
      %p131 = scmp.eq.s32.totalorder %s22, 0
      %p132 = por %p130, %p131
      %p133 = scmp.ne.s32.totalorder %s121, %s122
      %p134 = scmp.eq.s32.totalorder %s23, 3
      %p135 = por %p133, %p134
      %p137 = scmp.ne.s32.totalorder %s122, %s136
      %p138 = scmp.eq.s32.totalorder %s23, 0
      %p139 = por %p137, %p138
      %p140 = scmp.le.s32.totalorder 1, %s17
      %p141 = scmp.lt.s32.totalorder %s17, 5
      %p142 = pnand %p140, %p141
      %p143 = pneg %p142
      // Predicated region
      $region9: #{tpu_custom_call.1} parent=5 // pred_check
        _
      $region10: #{tpu_custom_call.1} parent=5 // pred_check_branch
        %145 = sbr.rel (%p142) target = $region12
      $region11: #{tpu_custom_call.1} parent=5 // pred_region
        %s146 = ssub.s32 %s17, 1
        // Predicated region
        $region13: #{tpu_custom_call.1} parent=11 // pred_check
          %p147 = pneg %p90
        $region14: #{tpu_custom_call.1} parent=11 // pred_check_branch
          %149 = sbr.rel (%p147) target = $region16
        $region15: #{tpu_custom_call.1} parent=11 // pred_region
          _
        $region16: #{tpu_custom_call.1} parent=11 // pred_fallthru
          _
        // Predicated region
        $region17: #{tpu_custom_call.1} parent=11 // pred_check
          %p150 = pneg %p111
        $region18: #{tpu_custom_call.1} parent=11 // pred_check_branch
          %152 = sbr.rel (%p150) target = $region20
        $region19: #{tpu_custom_call.1} parent=11 // pred_region
          _
        $region20: #{tpu_custom_call.1} parent=11 // pred_fallthru
          _
      $region12: #{tpu_custom_call.1} parent=5 // pred_fallthru
        _
      %p153 = scmp.lt.s32.totalorder %s17, 4
      // Predicated region
      $region21: #{tpu_custom_call.1} parent=5 // pred_check
        %p154 = pneg %p153
      $region22: #{tpu_custom_call.1} parent=5 // pred_check_branch
        %156 = sbr.rel (%p154) target = $region24
      $region23: #{tpu_custom_call.1} parent=5 // pred_region
        // Predicated region
        $region25: #{tpu_custom_call.1} parent=23 // pred_check
          %p157 = pneg %p37
        $region26: #{tpu_custom_call.1} parent=23 // pred_check_branch
          %159 = sbr.rel (%p157) target = $region28
        $region27: #{tpu_custom_call.1} parent=23 // pred_region
          %s160 = sand.u32 %s27, 1
          %s161 = scalar_lea.sflag [#allocation3], %s160
          %s162 = sand.u32 %s27, 1
          %s163 = smul.addr %s162, 2
          %s164 = scalar_lea.vmem [#allocation2], %s163
          %s165 = smul.u32 2, %s17
          %s167 = ssub.s32 32, 32
          %168 = vsyncadd %s161, %s167
          %s169 = smul.addr %s165, 16
          %s170 = scalar_lea.hbm %s0, %s169
          %s172 = sshll.u32 %s164, 4
          %s173 = int_to_ptr.vmem [resolvable:$true] %s172
          %175 = dma.hbm_to_vmem [thread:$0]  %s170, 32, %s173, %s161
        $region28: #{tpu_custom_call.1} parent=23 // pred_fallthru
          _
        // Predicated region
        $region29: #{tpu_custom_call.1} parent=23 // pred_check
          %p176 = pneg %p63
        $region30: #{tpu_custom_call.1} parent=23 // pred_check_branch
          %178 = sbr.rel (%p176) target = $region32
        $region31: #{tpu_custom_call.1} parent=23 // pred_region
          %s179 = sand.u32 %s53, 1
          %s180 = scalar_lea.sflag [#allocation6], %s179
          %s181 = sand.u32 %s53, 1
          %s182 = smul.addr %s181, 128
          %s183 = scalar_lea.vmem [#allocation5], %s182
          %s184 = smul.u32 32, %s17
          %s186 = ssub.s32 2048, 2048
          %187 = vsyncadd %s180, %s186
          %s188 = smul.addr %s184, 64
          %s189 = scalar_lea.hbm %s1, %s188
          %s190 = sshll.u32 %s183, 4
          %s191 = int_to_ptr.vmem [resolvable:$true] %s190
          %196 = dma.hbm_to_vmem [thread:$0]  %s189, 2048, %s191, %s180, 64, 64, 4
        $region32: #{tpu_custom_call.1} parent=23 // pred_fallthru
          _
      $region24: #{tpu_custom_call.1} parent=5 // pred_fallthru
        _
      %p197 = scmp.le.s32.totalorder 1, %s17
      %p198 = scmp.lt.s32.totalorder %s17, 5
      %p199 = pnand %p197, %p198
      %p200 = pneg %p199
      // Predicated region
      $region33: #{tpu_custom_call.1} parent=5 // pred_check
        _
      $region34: #{tpu_custom_call.1} parent=5 // pred_check_branch
        %202 = sbr.rel (%p199) target = $region36
      $region35: #{tpu_custom_call.1} parent=5 // pred_region
        %s203 = ssub.s32 %s17, 1
        %s204 = sand.u32 %s30, 1
        %s205 = scalar_lea.sflag [#allocation3], %s204
        %s206 = sand.u32 %s30, 1
        %s207 = smul.addr %s206, 2
        %s208 = scalar_lea.vmem [#allocation2], %s207
        // Predicated region
        $region37: #{tpu_custom_call.1} parent=35 // pred_check
          %p209 = pneg %p43
        $region38: #{tpu_custom_call.1} parent=35 // pred_check_branch
          %211 = sbr.rel (%p209) target = $region40
        $region39: #{tpu_custom_call.1} parent=35 // pred_region
          %212 = dma.done %s205, 32
        $region40: #{tpu_custom_call.1} parent=35 // pred_fallthru
          _
        %s213 = sand.u32 %s56, 1
        %s214 = scalar_lea.sflag [#allocation6], %s213
        %s215 = sand.u32 %s56, 1
        %s216 = smul.addr %s215, 128
        %s217 = scalar_lea.vmem [#allocation5], %s216
        // Predicated region
        $region41: #{tpu_custom_call.1} parent=35 // pred_check
          %p218 = pneg %p69
        $region42: #{tpu_custom_call.1} parent=35 // pred_check_branch
          %220 = sbr.rel (%p218) target = $region44
        $region43: #{tpu_custom_call.1} parent=35 // pred_region
          %221 = dma.done %s214, 2048
        $region44: #{tpu_custom_call.1} parent=35 // pred_fallthru
          _
        %s222 = sand.u32 %s30, 1
        %s223 = scalar_lea.sflag [#allocation3], %s222
        %s224 = sand.u32 %s30, 1
        %s225 = smul.addr %s224, 2
        %s226 = scalar_lea.vmem [#allocation2], %s225
        %p227 = pneg %p43
        %p228 = pneg %p40
        %s229 = sand.u32 %s56, 1
        %s230 = scalar_lea.sflag [#allocation6], %s229
        %s231 = sand.u32 %s56, 1
        %s232 = smul.addr %s231, 128
        %s233 = scalar_lea.vmem [#allocation5], %s232
        %p234 = pneg %p69
        %p235 = pneg %p66
        %p236 = pneg %p90
        %p237 = pneg %p87
        %p238 = pneg %p111
        %p239 = pneg %p108
        %p240 = pneg %p132
        %p241 = pneg %p129
        %s242 = smul.u32 2, %s22
        %s243 = smul.u32 32, %s22
        %p245 = scmp.eq.s32.totalorder %s22, 0
        // Predicated region
        $region45: #{tpu_custom_call.1} parent=35 // pred_check
          %p246 = pneg %p245
        $region46: #{tpu_custom_call.1} parent=35 // pred_check_branch
          %248 = sbr.rel (%p246) target = $region48
        $region47: #{tpu_custom_call.1} parent=35 // pred_region
          %249 = vst [vmem:[#allocation7] sm:$0x3] 0.0
        $region48: #{tpu_custom_call.1} parent=35 // pred_fallthru
          _
        %v250 = vld [vmem:[#allocation7] sm:$0x3]
        %v251 = vld [vmem:[%s208] sm:$0x3]
        %v252 = vld [vmem:[%s217] sm:$0xf]
        %v253 = vld [vmem:[%s217 + $0x4] sm:$0xf]
        %v254 = vld [vmem:[%s217 + $0x8] sm:$0xf]
        %v255 = vld [vmem:[%s217 + $0xc] sm:$0xf]
        %v256 = vld [vmem:[%s217 + $0x10] sm:$0xf]
        %v257 = vld [vmem:[%s217 + $0x14] sm:$0xf]
        %v258 = vld [vmem:[%s217 + $0x18] sm:$0xf]
        %v259 = vld [vmem:[%s217 + $0x1c] sm:$0xf]
        %v260 = vld [vmem:[%s217 + $0x20] sm:$0xf]
        %v261 = vld [vmem:[%s217 + $0x24] sm:$0xf]
        %v262 = vld [vmem:[%s217 + $0x28] sm:$0xf]
        %v263 = vld [vmem:[%s217 + $0x2c] sm:$0xf]
        %v264 = vld [vmem:[%s217 + $0x30] sm:$0xf]
        %v265 = vld [vmem:[%s217 + $0x34] sm:$0xf]
        %v266 = vld [vmem:[%s217 + $0x38] sm:$0xf]
        %v267 = vld [vmem:[%s217 + $0x3c] sm:$0xf]
        %v268 = vld [vmem:[%s217 + $0x40] sm:$0xf]
        %v269 = vld [vmem:[%s217 + $0x44] sm:$0xf]
        %v270 = vld [vmem:[%s217 + $0x48] sm:$0xf]
        %v271 = vld [vmem:[%s217 + $0x4c] sm:$0xf]
        %v272 = vld [vmem:[%s217 + $0x50] sm:$0xf]
        %v273 = vld [vmem:[%s217 + $0x54] sm:$0xf]
        %v274 = vld [vmem:[%s217 + $0x58] sm:$0xf]
        %v275 = vld [vmem:[%s217 + $0x5c] sm:$0xf]
        %v276 = vld [vmem:[%s217 + $0x60] sm:$0xf]
        %v277 = vld [vmem:[%s217 + $0x64] sm:$0xf]
        %v278 = vld [vmem:[%s217 + $0x68] sm:$0xf]
        %v279 = vld [vmem:[%s217 + $0x6c] sm:$0xf]
        %v280 = vld [vmem:[%s217 + $0x70] sm:$0xf]
        %v281 = vld [vmem:[%s217 + $0x74] sm:$0xf]
        %v282 = vld [vmem:[%s217 + $0x78] sm:$0xf]
        %v283 = vld [vmem:[%s217 + $0x7c] sm:$0xf]
        %v286 = vunpack.c.l.s4 1966171168
        %v287 = vunpack.c.0.s8 %v286
        %v288 = vlaneseq
        %v289 = vshrl.u32 %v288, 7
        %v290 = vsub.s32 %v287, %v289
        %v291 = vrot.slane %v251, %v290
        %v292 = vcombine.high %v291, %v291
        %v294 = vunpack.c.l.s4 1966171168
        %v295 = vunpack.c.0.s8 %v294
        %v296 = vlaneseq
        %v297 = vshrl.u32 %v296, 7
        %v298 = vsub.s32 %v295, %v297
        %v299 = vrot.slane %v291, %v298
        %v301 = vunpack.c.l.s4 1966171168
        %v302 = vunpack.c.0.s8 %v301
        %v303 = vlaneseq
        %v304 = vshrl.u32 %v303, 7
        %v305 = vsub.s32 %v302, %v304
        %v306 = vrot.slane %v292, %v305
        %v341 = vunpack.c.l.b16 %v252
        %v342 = vunpack.c.l.b16 %v253
        %v343 = vunpack.c.l.b16 %v254
        %v344 = vunpack.c.l.b16 %v255
        %v345 = vunpack.c.l.b16 %v256
        %v346 = vunpack.c.l.b16 %v257
        %v347 = vunpack.c.l.b16 %v258
        %v348 = vunpack.c.l.b16 %v259
        %v349 = vunpack.c.l.b16 %v260
        %v350 = vunpack.c.l.b16 %v261
        %v351 = vunpack.c.l.b16 %v262
        %v352 = vunpack.c.l.b16 %v263
        %v353 = vunpack.c.l.b16 %v264
        %v354 = vunpack.c.l.b16 %v265
        %v355 = vunpack.c.l.b16 %v266
        %v356 = vunpack.c.l.b16 %v267
        %v357 = vunpack.c.l.b16 %v268
        %v358 = vunpack.c.l.b16 %v269
        %v359 = vunpack.c.l.b16 %v270
        %v360 = vunpack.c.l.b16 %v271
        %v361 = vunpack.c.l.b16 %v272
        %v362 = vunpack.c.l.b16 %v273
        %v363 = vunpack.c.l.b16 %v274
        %v364 = vunpack.c.l.b16 %v275
        %v365 = vunpack.c.l.b16 %v276
        %v366 = vunpack.c.l.b16 %v277
        %v367 = vunpack.c.l.b16 %v278
        %v368 = vunpack.c.l.b16 %v279
        %v369 = vunpack.c.l.b16 %v280
        %v370 = vunpack.c.l.b16 %v281
        %v371 = vunpack.c.l.b16 %v282
        %v372 = vunpack.c.l.b16 %v283
        %v373 = vpack.c.b16 %v342, %v341
        %v374 = vpack.c.b16 %v344, %v343
        %v375 = vpack.c.b16 %v346, %v345
        %v376 = vpack.c.b16 %v348, %v347
        %v377 = vpack.c.b16 %v350, %v349
        %v378 = vpack.c.b16 %v352, %v351
        %v379 = vpack.c.b16 %v354, %v353
        %v380 = vpack.c.b16 %v356, %v355
        %v381 = vpack.c.b16 %v358, %v357
        %v382 = vpack.c.b16 %v360, %v359
        %v383 = vpack.c.b16 %v362, %v361
        %v384 = vpack.c.b16 %v364, %v363
        %v385 = vpack.c.b16 %v366, %v365
        %v386 = vpack.c.b16 %v368, %v367
        %v387 = vpack.c.b16 %v370, %v369
        %v388 = vpack.c.b16 %v372, %v371
        %405 = vmatprep.subr.bf16.mxu0 0
        %406 = vmatpush1.bf16.msra.mxu0 %v373
        %407 = vmatprep.subr.bf16.mxu0 0
        %408 = vmatpush1.bf16.msra.mxu0 %v374
        %409 = vmatprep.subr.bf16.mxu0 0
        %410 = vmatpush1.bf16.msra.mxu0 %v375
        %411 = vmatprep.subr.bf16.mxu0 0
        %412 = vmatpush1.bf16.msra.mxu0 %v376
        %413 = vmatprep.subr.bf16.mxu0 0
        %414 = vmatpush1.bf16.msra.mxu0 %v377
        %415 = vmatprep.subr.bf16.mxu0 0
        %416 = vmatpush1.bf16.msra.mxu0 %v378
        %417 = vmatprep.subr.bf16.mxu0 0
        %418 = vmatpush1.bf16.msra.mxu0 %v379
        %419 = vmatprep.subr.bf16.mxu0 0
        %420 = vmatpush1.bf16.msra.mxu0 %v380
        %421 = vmatprep.subr.bf16.mxu0 0
        %422 = vmatpush1.bf16.msra.mxu0 %v381
        %423 = vmatprep.subr.bf16.mxu0 0
        %424 = vmatpush1.bf16.msra.mxu0 %v382
        %425 = vmatprep.subr.bf16.mxu0 0
        %426 = vmatpush1.bf16.msra.mxu0 %v383
        %427 = vmatprep.subr.bf16.mxu0 0
        %428 = vmatpush1.bf16.msra.mxu0 %v384
        %429 = vmatprep.subr.bf16.mxu0 0
        %430 = vmatpush1.bf16.msra.mxu0 %v385
        %431 = vmatprep.subr.bf16.mxu0 0
        %432 = vmatpush1.bf16.msra.mxu0 %v386
        %433 = vmatprep.subr.bf16.mxu0 0
        %434 = vmatpush1.bf16.msra.mxu0 %v387
        %435 = vmatprep.subr.bf16.mxu0 0
        %436 = vmatpush1.bf16.msra.mxu0 %v388
        %437 = vmatprep.mubr.bf16.mxu0 %v306
        %438 = vmatmul.mubr.bf16.gmra.mrb[0].mxu0 %v299
        %v439 = vpop.f32.mrb[0].mxu0
        %v440 = vadd.f32 0.0, %v439
        %v441 = vpop.f32.mrb[0].mxu0
        %v442 = vpop.f32.mrb[0].mxu0
        %v443 = vpop.f32.mrb[0].mxu0
        %444 = vdwg.mxu0
        %v445 = vadd.f32 %v250, %v440
        %446 = vst [vmem:[#allocation7] sm:$0x3] %v445
        %p447 = scmp.eq.s32.totalorder %s22, 3
        // Predicated region
        $region49: #{tpu_custom_call.1} parent=35 // pred_check
          %p448 = pneg %p447
        $region50: #{tpu_custom_call.1} parent=35 // pred_check_branch
          %450 = sbr.rel (%p448) target = $region52
        $region51: #{tpu_custom_call.1} parent=35 // pred_region
          %v451 = vld [vmem:[#allocation7] sm:$0x3]
          %v452 = vld [vmem:[%s2] sm:$0x1]
          %v454 = vlaneseq
          %v455 = vshrl.u32 %v454, 7
          %v456 = vsub.s32 0, %v455
          %v457 = vrot.slane %v452, %v456
          %v459 = vadd.f32 %v451, %v457
          %v460 = vand.u32 2147483647, %v459
          %vm461 = vcmask 1041408
          %v462 = vsel %vm461, %v460, 0.0
          %463 = vadd.xlane.f32.xlu0 %v462
          %v464 = vpop.xlane.xlu0 %463
          %v465 = vrot.slane %v464, 4
          %v466 = vadd.f32 %v464, %v465
          %v467 = vrot.slane %v466, 2
          %v468 = vadd.f32 %v466, %v467
          %v469 = vrot.slane %v468, 1
          %v470 = vadd.f32 %v468, %v469
          %s471 = vtos %v470
          %s472 = smul.f32 %s471, 0.05
          %s473 = smul.f32 %s472, 0.5
          %v474 = vld [vmem:[%s3] sm:$0x3]
          %v475 = vstv %s473
          %v476 = vmul.f32 %v475, %v474
          %v477 = vadd.f32 %v459, %v476
          %478 = vst [vmem:[#allocation7] sm:$0x3] %v477
        $region52: #{tpu_custom_call.1} parent=35 // pred_fallthru
          _
        // Predicated region
        $region53: #{tpu_custom_call.1} parent=35 // pred_check
          %p479 = pneg %p129
        $region54: #{tpu_custom_call.1} parent=35 // pred_check_branch
          %481 = sbr.rel (%p479) target = $region56
        $region55: #{tpu_custom_call.1} parent=35 // pred_region
          %s483 = ssub.s32 32, 32
          %484 = vsyncadd [#allocation4], %s483
          %s486 = sshll.u32 [#allocation7], 4
          %s487 = int_to_ptr.vmem [resolvable:$true] %s486
          %489 = dma.vmem_to_hbm [thread:$0]  %s487, 32, %s4, [#allocation4]
        $region56: #{tpu_custom_call.1} parent=35 // pred_fallthru
          _
        // Predicated region
        $region57: #{tpu_custom_call.1} parent=35 // pred_check
          %p490 = pneg %p129
        $region58: #{tpu_custom_call.1} parent=35 // pred_check_branch
          %492 = sbr.rel (%p490) target = $region60
        $region59: #{tpu_custom_call.1} parent=35 // pred_region
          %493 = dma.done [#allocation4], 32
        $region60: #{tpu_custom_call.1} parent=35 // pred_fallthru
          _
      $region36: #{tpu_custom_call.1} parent=5 // pred_fallthru
        _
      %p494 = scmp.le.s32.totalorder 2, %s17
      // Predicated region
      $region61: #{tpu_custom_call.1} parent=5 // pred_check
        %p495 = pneg %p494
      $region62: #{tpu_custom_call.1} parent=5 // pred_check_branch
        %497 = sbr.rel (%p495) target = $region64
      $region63: #{tpu_custom_call.1} parent=5 // pred_region
        %s498 = ssub.s32 %s17, 2
      $region64: #{tpu_custom_call.1} parent=5 // pred_fallthru
        _
    $region6: #{tpu_custom_call.1} parent=1 // loop_footer
      %s21 = sadd.s32 1, %s17
    $region7: #{tpu_custom_call.1} parent=1 // loop_footer_branch
      %16 = sbr.rel target = $region3
    $region8: #{tpu_custom_call.1} parent=1 // loop_exit
      _
    %499 = vsyncpa [#allocation3], 1
    %s500 = scalar_lea.sflag [#allocation3], 1
    %501 = vsyncpa %s500, 1
    %502 = vsyncpa [#allocation6], 1
    %s503 = scalar_lea.sflag [#allocation6], 1
    %504 = vsyncpa %s503, 1
    %505 = vsyncpa [#allocation4], 1
    %s506 = scalar_lea.sflag [#allocation4], 1
    %507 = vsyncpa %s506, 1

</llo_original>
